<compile_context>
chip_gen: v5e
topology: v5e:2x2
jax: 0.10.0
libtpu: 0.0.40
codegen_flags: <defaults>
</compile_context>

<pallas_src>
import functools

import jax
import jax.numpy as jnp
import numpy as np
from jax.experimental import pallas as pl
from jax.experimental.pallas import tpu as pltpu

# ----------------------------- config ---------------------------------------
CFG = dict(emb_dim=32, context_length=8, n_heads=4, drop_rate=0.0, qkv_bias=True)
EPS = 1e-5


# --------------------------- kernel helpers ----------------------------------
def _gelu(x):
    c = jnp.sqrt(jnp.float32(2.0 / jnp.pi))
    return 0.5 * x * (1.0 + jnp.tanh(c * (x + 0.044715 * x * x * x)))


def _layernorm(x, scale, shift):
    mean = jnp.mean(x, axis=-1, keepdims=True)
    var = jnp.mean((x - mean) ** 2, axis=-1, keepdims=True)      # unbiased=False
    return scale * ((x - mean) * jax.lax.rsqrt(var + EPS)) + shift


# ------------------------------ kernel ---------------------------------------
def transformer_block_kernel(
    x_ref,                                  # (B*T, E)
    wqkv_ref,                               # (E, 3E)  fused Q/K/V weight, Q cols pre-scaled by 1/sqrt(Dh)
    wo_ref,                                 # (E, E)
    w1_ref, w2_ref,                         # (E, 4E), (4E, E)
    vec_ref,                                # (8, max(4E,3E)) packed bias / LN vector slab
    o_ref,                                  # (B*T, E)
    *, batch, seq_len, num_heads,
):
    B, T, H = batch, seq_len, num_heads
    x = x_ref[...]                          # (B*T, E) whole-batch slab
    n, E = x.shape
    Dh = E // H
    F = w1_ref.shape[1]                     # FFN hidden dim (4E)

    # ---- unpack the single packed parameter slab (one DMA for 8 vectors) ----
    bqkv = vec_ref[0:1, 0:3 * E]            # Q part pre-scaled by 1/sqrt(Dh)
    bo   = vec_ref[1:2, 0:E]
    g1   = vec_ref[2:3, 0:E]
    s1   = vec_ref[3:4, 0:E]
    g2   = vec_ref[4:5, 0:E]
    s2   = vec_ref[5:6, 0:E]
    b1   = vec_ref[6:7, 0:F]
    b2   = vec_ref[7:8, 0:E]

    # ---- sublayer 1: LN -> causal MHA -> residual ----
    h = _layernorm(x, g1, s1)                                                    # (B*T, E)

    # single fused QKV projection (scale already folded into weights/bias)
    qkv = jnp.dot(h, wqkv_ref[...], preferred_element_type=jnp.float32) + bqkv   # (B*T, 3E)
    q = qkv[:, 0 * E:1 * E].reshape(B, T, E)
    k = qkv[:, 1 * E:2 * E].reshape(B, T, E)
    v = qkv[:, 2 * E:3 * E].reshape(B, T, E)

    # additive causal mask, built once and shared by all heads
    row = jax.lax.broadcasted_iota(jnp.int32, (T, T), 0)
    col = jax.lax.broadcasted_iota(jnp.int32, (T, T), 1)
    neg_bias = jnp.where(col > row, jnp.float32(-1e30), jnp.float32(0.0))        # (T, T)

    # residual + output-projection bias; per-head contributions accumulate into
    # this with the head merge folded into row-slices of W_o (no concatenate).
    acc = x + bo                                                                 # (B*T, E)
    for hd in range(H):                     # static unroll over heads
        sl = slice(hd * Dh, (hd + 1) * Dh)
        qh, kh, vh = q[:, :, sl], k[:, :, sl], v[:, :, sl]                       # (B, T, Dh)
        s = jnp.einsum('btd,bsd->bts', qh, kh,
                       preferred_element_type=jnp.float32) + neg_bias            # (B, T, T)
        m = jnp.max(s, axis=-1, keepdims=True)
        p = jnp.exp(s - m)
        l = jnp.sum(p, axis=-1, keepdims=True)
        w = p * pl.reciprocal(l, approx=False)
        ctx_h = jnp.einsum('bts,bsd->btd', w, vh,
                           preferred_element_type=jnp.float32)                   # (B, T, Dh)
        # head-merge fused into the output projection: static sublane slice of W_o
        acc = acc + jnp.dot(ctx_h.reshape(n, Dh),
                            wo_ref[hd * Dh:(hd + 1) * Dh, :],
                            preferred_element_type=jnp.float32)
    x1 = acc

    # ---- sublayer 2: LN -> FeedForward(GELU) -> residual ----
    h2 = _layernorm(x1, g2, s2)
    f = jnp.dot(h2, w1_ref[...], preferred_element_type=jnp.float32) + b1
    f = _gelu(f)
    f = jnp.dot(f, w2_ref[...], preferred_element_type=jnp.float32) + b2

    o_ref[...] = f + x1


# ------------------------------ wrapper ---------------------------------------
def transformer_block(x, params, num_heads):
    B, T, E = x.shape
    Dh = E // num_heads
    F = params["w1"].shape[1]               # 4E
    row_w = max(F, 3 * E)

    # Fold the 1/sqrt(Dh) attention scale into the Q projection (trace-time, free).
    inv_sqrt_dh = jnp.float32(1.0 / np.sqrt(Dh))
    wqkv = jnp.concatenate(
        [params["wq"] * inv_sqrt_dh, params["wk"], params["wv"]], axis=1)        # (E, 3E)
    bqkv = jnp.concatenate(
        [params["bq"] * inv_sqrt_dh, params["bk"], params["bv"]], axis=1)        # (1, 3E)

    # Pack all small bias / LN vectors into a single (8, row_w) slab -> one DMA.
    def _pad_row(v):
        return jnp.pad(v, ((0, 0), (0, row_w - v.shape[1])))

    vecs = jnp.concatenate(
        [_pad_row(bqkv), _pad_row(params["bo"]),
         _pad_row(params["g1"]), _pad_row(params["s1"]),
         _pad_row(params["g2"]), _pad_row(params["s2"]),
         _pad_row(params["b1"]), _pad_row(params["b2"])], axis=0)                # (8, row_w)

    kernel = functools.partial(
        transformer_block_kernel, batch=B, seq_len=T, num_heads=num_heads)

    n_inputs = 6  # x, wqkv, wo, w1, w2, vecs

    # Grid-less call: everything (a few hundred KiB) lives in VMEM for a single
    # kernel invocation -> no per-step pipeline overhead, no weight double-buffering.
    # TODO(synk): for production-size B*T / E, switch to a row-blocked "parallel"
    # grid (weights resident via constant index_map) and bf16 MXU operands.
    out2d = pl.pallas_call(
        kernel,
        out_shape=jax.ShapeDtypeStruct((B * T, E), jnp.float32),
        in_specs=[pl.BlockSpec(memory_space=pltpu.MemorySpace.VMEM)
                  for _ in range(n_inputs)],
        out_specs=pl.BlockSpec(memory_space=pltpu.MemorySpace.VMEM),
    )(x.reshape(B * T, E), wqkv, params["wo"], params["w1"], params["w2"], vecs)

    return out2d.reshape(B, T, E)


# --------------------------- pure-JAX reference -------------------------------
def reference_block(x, p, num_heads):
    def ln(v, g, s):
        mean = v.mean(-1, keepdims=True)
        var = ((v - mean) ** 2).mean(-1, keepdims=True)
        return g * ((v - mean) / jnp.sqrt(var + EPS)) + s

    B, T, E = x.shape
    Dh = E // num_heads
    h = ln(x, p["g1"], p["s1"])
    q = h @ p["wq"] + p["bq"]
    k = h @ p["wk"] + p["bk"]
    v = h @ p["wv"] + p["bv"]
    q = q.reshape(B, T, num_heads, Dh).transpose(0, 2, 1, 3)
    k = k.reshape(B, T, num_heads, Dh).transpose(0, 2, 1, 3)
    v = v.reshape(B, T, num_heads, Dh).transpose(0, 2, 1, 3)
    scores = jnp.einsum("bhtd,bhsd->bhts", q, k)
    mask = jnp.triu(jnp.ones((T, T), bool), k=1)
    scores = jnp.where(mask, -jnp.inf, scores)
    w = jax.nn.softmax(scores / jnp.sqrt(jnp.float32(Dh)), axis=-1)
    ctx = jnp.einsum("bhts,bhsd->bhtd", w, v).transpose(0, 2, 1, 3).reshape(B, T, E)
    attn = ctx @ p["wo"] + p["bo"]
    x1 = attn + x
    h2 = ln(x1, p["g2"], p["s2"])
    f = h2 @ p["w1"] + p["b1"]
    c = jnp.sqrt(jnp.float32(2.0 / jnp.pi))
    f = 0.5 * f * (1.0 + jnp.tanh(c * (f + 0.044715 * f ** 3)))
    f = f @ p["w2"] + p["b2"]
    return f + x1


# ------------------------------- main -----------------------------------------
if __name__ == "__main__":
    B, T = 2, CFG["context_length"]
    E, H = CFG["emb_dim"], CFG["n_heads"]

    key = jax.random.PRNGKey(0)
    keys = jax.random.split(key, 12)

    def w(k, shape, scale=0.02):
        return (scale * jax.random.normal(k, shape)).astype(jnp.float32)

    # all linear weights stored as (in_features, out_features); biases as (1, out)
    params = dict(
        wq=w(keys[0], (E, E)), bq=w(keys[1], (1, E)),
        wk=w(keys[2], (E, E)), bk=w(keys[3], (1, E)),
        wv=w(keys[4], (E, E)), bv=w(keys[5], (1, E)),
        wo=w(keys[6], (E, E)), bo=w(keys[7], (1, E)),
        g1=jnp.ones((1, E), jnp.float32), s1=jnp.zeros((1, E), jnp.float32),
        g2=jnp.ones((1, E), jnp.float32), s2=jnp.zeros((1, E), jnp.float32),
        w1=w(keys[8], (E, 4 * E)), b1=w(keys[9], (1, 4 * E)),
        w2=w(keys[10], (4 * E, E)), b2=w(keys[11], (1, E)),
    )

    x = jax.random.normal(jax.random.PRNGKey(42), (B, T, E), jnp.float32)

    out = transformer_block(x, params, H)
    out = jax.block_until_ready(out)

    ref = reference_block(x, params, H)
    assert out.shape == (B, T, E)
    np.testing.assert_allclose(np.asarray(out), np.asarray(ref), atol=1e-4, rtol=1e-4)

    print("KERNEL_OK")
</pallas_src>

<mosaic_0001>
module attributes {stable_mosaic.version = 11 : i64} {
  func.func @transformer_block_kernel(%arg0: memref<16x32xf32, #tpu.memory_space<vmem>>, %arg1: memref<32x96xf32, #tpu.memory_space<vmem>>, %arg2: memref<32x32xf32, #tpu.memory_space<vmem>>, %arg3: memref<32x128xf32, #tpu.memory_space<vmem>>, %arg4: memref<128x32xf32, #tpu.memory_space<vmem>>, %arg5: memref<8x128xf32, #tpu.memory_space<vmem>>, %arg6: memref<16x32xf32, #tpu.memory_space<vmem>>) attributes {dimension_semantics = [], scalar_prefetch = 0 : i64, scratch_operands = 0 : i64, tpu.core_type = #tpu.core_type<tc>} {
    %c0 = arith.constant 0 : index
    %c0_0 = arith.constant 0 : index
    %0 = vector.load %arg0[%c0, %c0_0] : memref<16x32xf32, #tpu.memory_space<vmem>>, vector<16x32xf32>
    %c0_1 = arith.constant 0 : index
    %c0_2 = arith.constant 0 : index
    %1 = vector.load %arg5[%c0_1, %c0_2] : memref<8x128xf32, #tpu.memory_space<vmem>>, vector<1x96xf32>
    %c1 = arith.constant 1 : index
    %c0_3 = arith.constant 0 : index
    %2 = vector.load %arg5[%c1, %c0_3] : memref<8x128xf32, #tpu.memory_space<vmem>>, vector<1x32xf32>
    %c2 = arith.constant 2 : index
    %c0_4 = arith.constant 0 : index
    %3 = vector.load %arg5[%c2, %c0_4] : memref<8x128xf32, #tpu.memory_space<vmem>>, vector<1x32xf32>
    %c3 = arith.constant 3 : index
    %c0_5 = arith.constant 0 : index
    %4 = vector.load %arg5[%c3, %c0_5] : memref<8x128xf32, #tpu.memory_space<vmem>>, vector<1x32xf32>
    %c4 = arith.constant 4 : index
    %c0_6 = arith.constant 0 : index
    %5 = vector.load %arg5[%c4, %c0_6] : memref<8x128xf32, #tpu.memory_space<vmem>>, vector<1x32xf32>
    %c5 = arith.constant 5 : index
    %c0_7 = arith.constant 0 : index
    %6 = vector.load %arg5[%c5, %c0_7] : memref<8x128xf32, #tpu.memory_space<vmem>>, vector<1x32xf32>
    %c6 = arith.constant 6 : index
    %c0_8 = arith.constant 0 : index
    %7 = vector.load %arg5[%c6, %c0_8] : memref<8x128xf32, #tpu.memory_space<vmem>>, vector<1x128xf32>
    %c7 = arith.constant 7 : index
    %c0_9 = arith.constant 0 : index
    %8 = vector.load %arg5[%c7, %c0_9] : memref<8x128xf32, #tpu.memory_space<vmem>>, vector<1x32xf32>
    %cst = arith.constant dense<0.000000e+00> : vector<16xf32>
    %9 = vector.multi_reduction <add>, %0, %cst [1] : vector<16x32xf32> to vector<16xf32>
    %10 = vector.shape_cast %9 : vector<16xf32> to vector<16x1xf32>
    %cst_10 = arith.constant 3.200000e+01 : f32
    %11 = vector.broadcast %cst_10 : f32 to vector<16x1xf32>
    %12 = arith.divf %10, %11 : vector<16x1xf32>
    %13 = vector.broadcast %12 : vector<16x1xf32> to vector<16x32xf32>
    %14 = arith.subf %0, %13 : vector<16x32xf32>
    %15 = arith.mulf %14, %14 : vector<16x32xf32>
    %cst_11 = arith.constant dense<0.000000e+00> : vector<16xf32>
    %16 = vector.multi_reduction <add>, %15, %cst_11 [1] : vector<16x32xf32> to vector<16xf32>
    %17 = vector.shape_cast %16 : vector<16xf32> to vector<16x1xf32>
    %cst_12 = arith.constant 3.200000e+01 : f32
    %18 = vector.broadcast %cst_12 : f32 to vector<16x1xf32>
    %19 = arith.divf %17, %18 : vector<16x1xf32>
    %20 = vector.broadcast %12 : vector<16x1xf32> to vector<16x32xf32>
    %21 = arith.subf %0, %20 : vector<16x32xf32>
    %cst_13 = arith.constant 9.99999974E-6 : f32
    %22 = vector.broadcast %cst_13 : f32 to vector<16x1xf32>
    %23 = arith.addf %19, %22 : vector<16x1xf32>
    %24 = math.rsqrt %23 : vector<16x1xf32>
    %25 = vector.broadcast %24 : vector<16x1xf32> to vector<16x32xf32>
    %26 = arith.mulf %21, %25 : vector<16x32xf32>
    %27 = vector.broadcast %3 : vector<1x32xf32> to vector<16x32xf32>
    %28 = arith.mulf %27, %26 : vector<16x32xf32>
    %29 = vector.broadcast %4 : vector<1x32xf32> to vector<16x32xf32>
    %30 = arith.addf %28, %29 : vector<16x32xf32>
    %c0_14 = arith.constant 0 : index
    %c0_15 = arith.constant 0 : index
    %31 = vector.load %arg1[%c0_14, %c0_15] : memref<32x96xf32, #tpu.memory_space<vmem>>, vector<32x96xf32>
    %cst_16 = arith.constant dense<0.000000e+00> : vector<16x96xf32>
    %32 = tpu.matmul %30, %31, %cst_16 {dimension_numbers = #tpu.dot_dimension_numbers<[1], [0], [0], [1], [0, 0, 1, 1], [], []>} : vector<16x32xf32>, vector<32x96xf32>, vector<16x96xf32> -> vector<16x96xf32>
    %33 = vector.broadcast %1 : vector<1x96xf32> to vector<16x96xf32>
    %34 = arith.addf %32, %33 : vector<16x96xf32>
    %35 = vector.extract_strided_slice %34 {offsets = [0, 0], sizes = [16, 32], strides = [1, 1]} : vector<16x96xf32> to vector<16x32xf32>
    %36 = vector.shape_cast %35 : vector<16x32xf32> to vector<2x8x32xf32>
    %37 = vector.extract_strided_slice %34 {offsets = [0, 32], sizes = [16, 32], strides = [1, 1]} : vector<16x96xf32> to vector<16x32xf32>
    %38 = vector.shape_cast %37 : vector<16x32xf32> to vector<2x8x32xf32>
    %39 = vector.extract_strided_slice %34 {offsets = [0, 64], sizes = [16, 32], strides = [1, 1]} : vector<16x96xf32> to vector<16x32xf32>
    %40 = vector.shape_cast %39 : vector<16x32xf32> to vector<2x8x32xf32>
    %41 = tpu.iota {dimensions = array<i32: 0>} : vector<8x8xi32>
    %42 = tpu.iota {dimensions = array<i32: 1>} : vector<8x8xi32>
    %43 = arith.cmpi sgt, %42, %41 : vector<8x8xi32>
    %cst_17 = arith.constant -1.000000e+30 : f32
    %cst_18 = arith.constant 0.000000e+00 : f32
    %44 = vector.broadcast %cst_17 : f32 to vector<8x8xf32>
    %45 = vector.broadcast %cst_18 : f32 to vector<8x8xf32>
    %46 = arith.select %43, %44, %45 : vector<8x8xi1>, vector<8x8xf32>
    %47 = vector.broadcast %2 : vector<1x32xf32> to vector<16x32xf32>
    %48 = arith.addf %0, %47 : vector<16x32xf32>
    %49 = vector.extract_strided_slice %36 {offsets = [0, 0, 0], sizes = [2, 8, 8], strides = [1, 1, 1]} : vector<2x8x32xf32> to vector<2x8x8xf32>
    %50 = vector.extract_strided_slice %38 {offsets = [0, 0, 0], sizes = [2, 8, 8], strides = [1, 1, 1]} : vector<2x8x32xf32> to vector<2x8x8xf32>
    %51 = vector.extract_strided_slice %40 {offsets = [0, 0, 0], sizes = [2, 8, 8], strides = [1, 1, 1]} : vector<2x8x32xf32> to vector<2x8x8xf32>
    "tpu.trace_start"() <{level = 10 : i32, message = "btd,bsd->bts"}> : () -> ()
    %cst_19 = arith.constant dense<0.000000e+00> : vector<2x8x8xf32>
    %52 = tpu.matmul %49, %50, %cst_19 {dimension_numbers = #tpu.dot_dimension_numbers<[2], [2], [1], [1], [0, 0, 0, 1, 1, 1], [0], [0]>} : vector<2x8x8xf32>, vector<2x8x8xf32>, vector<2x8x8xf32> -> vector<2x8x8xf32>
    "tpu.trace_stop"() : () -> ()
    %53 = vector.shape_cast %46 : vector<8x8xf32> to vector<1x8x8xf32>
    %54 = vector.broadcast %53 : vector<1x8x8xf32> to vector<2x8x8xf32>
    %55 = arith.addf %52, %54 : vector<2x8x8xf32>
    %cst_20 = arith.constant dense<0xFF800000> : vector<2x8xf32>
    %56 = vector.multi_reduction <maximumf>, %55, %cst_20 [2] : vector<2x8x8xf32> to vector<2x8xf32>
    %57 = vector.shape_cast %56 : vector<2x8xf32> to vector<2x8x1xf32>
    %58 = vector.broadcast %57 : vector<2x8x1xf32> to vector<2x8x8xf32>
    %59 = arith.subf %55, %58 : vector<2x8x8xf32>
    %60 = math.exp %59 : vector<2x8x8xf32>
    %cst_21 = arith.constant dense<0.000000e+00> : vector<2x8xf32>
    %61 = vector.multi_reduction <add>, %60, %cst_21 [2] : vector<2x8x8xf32> to vector<2x8xf32>
    %62 = vector.shape_cast %61 : vector<2x8xf32> to vector<2x8x1xf32>
    %63 = tpu.reciprocal %62 : vector<2x8x1xf32> -> vector<2x8x1xf32>
    %64 = vector.broadcast %63 : vector<2x8x1xf32> to vector<2x8x8xf32>
    %65 = arith.mulf %60, %64 : vector<2x8x8xf32>
    "tpu.trace_start"() <{level = 10 : i32, message = "bts,bsd->btd"}> : () -> ()
    %cst_22 = arith.constant dense<0.000000e+00> : vector<2x8x8xf32>
    %66 = tpu.matmul %65, %51, %cst_22 {dimension_numbers = #tpu.dot_dimension_numbers<[2], [1], [1], [2], [0, 0, 0, 1, 1, 2], [0], [0]>} : vector<2x8x8xf32>, vector<2x8x8xf32>, vector<2x8x8xf32> -> vector<2x8x8xf32>
    "tpu.trace_stop"() : () -> ()
    %67 = vector.shape_cast %66 : vector<2x8x8xf32> to vector<16x8xf32>
    %c0_23 = arith.constant 0 : index
    %c0_24 = arith.constant 0 : index
    %68 = vector.load %arg2[%c0_23, %c0_24] : memref<32x32xf32, #tpu.memory_space<vmem>>, vector<8x32xf32>
    %cst_25 = arith.constant dense<0.000000e+00> : vector<16x32xf32>
    %69 = tpu.matmul %67, %68, %cst_25 {dimension_numbers = #tpu.dot_dimension_numbers<[1], [0], [0], [1], [0, 0, 1, 1], [], []>} : vector<16x8xf32>, vector<8x32xf32>, vector<16x32xf32> -> vector<16x32xf32>
    %70 = arith.addf %48, %69 : vector<16x32xf32>
    %71 = vector.extract_strided_slice %36 {offsets = [0, 0, 8], sizes = [2, 8, 8], strides = [1, 1, 1]} : vector<2x8x32xf32> to vector<2x8x8xf32>
    %72 = vector.extract_strided_slice %38 {offsets = [0, 0, 8], sizes = [2, 8, 8], strides = [1, 1, 1]} : vector<2x8x32xf32> to vector<2x8x8xf32>
    %73 = vector.extract_strided_slice %40 {offsets = [0, 0, 8], sizes = [2, 8, 8], strides = [1, 1, 1]} : vector<2x8x32xf32> to vector<2x8x8xf32>
    "tpu.trace_start"() <{level = 10 : i32, message = "btd,bsd->bts"}> : () -> ()
    %cst_26 = arith.constant dense<0.000000e+00> : vector<2x8x8xf32>
    %74 = tpu.matmul %71, %72, %cst_26 {dimension_numbers = #tpu.dot_dimension_numbers<[2], [2], [1], [1], [0, 0, 0, 1, 1, 1], [0], [0]>} : vector<2x8x8xf32>, vector<2x8x8xf32>, vector<2x8x8xf32> -> vector<2x8x8xf32>
    "tpu.trace_stop"() : () -> ()
    %75 = vector.shape_cast %46 : vector<8x8xf32> to vector<1x8x8xf32>
    %76 = vector.broadcast %75 : vector<1x8x8xf32> to vector<2x8x8xf32>
    %77 = arith.addf %74, %76 : vector<2x8x8xf32>
    %cst_27 = arith.constant dense<0xFF800000> : vector<2x8xf32>
    %78 = vector.multi_reduction <maximumf>, %77, %cst_27 [2] : vector<2x8x8xf32> to vector<2x8xf32>
    %79 = vector.shape_cast %78 : vector<2x8xf32> to vector<2x8x1xf32>
    %80 = vector.broadcast %79 : vector<2x8x1xf32> to vector<2x8x8xf32>
    %81 = arith.subf %77, %80 : vector<2x8x8xf32>
    %82 = math.exp %81 : vector<2x8x8xf32>
    %cst_28 = arith.constant dense<0.000000e+00> : vector<2x8xf32>
    %83 = vector.multi_reduction <add>, %82, %cst_28 [2] : vector<2x8x8xf32> to vector<2x8xf32>
    %84 = vector.shape_cast %83 : vector<2x8xf32> to vector<2x8x1xf32>
    %85 = tpu.reciprocal %84 : vector<2x8x1xf32> -> vector<2x8x1xf32>
    %86 = vector.broadcast %85 : vector<2x8x1xf32> to vector<2x8x8xf32>
    %87 = arith.mulf %82, %86 : vector<2x8x8xf32>
    "tpu.trace_start"() <{level = 10 : i32, message = "bts,bsd->btd"}> : () -> ()
    %cst_29 = arith.constant dense<0.000000e+00> : vector<2x8x8xf32>
    %88 = tpu.matmul %87, %73, %cst_29 {dimension_numbers = #tpu.dot_dimension_numbers<[2], [1], [1], [2], [0, 0, 0, 1, 1, 2], [0], [0]>} : vector<2x8x8xf32>, vector<2x8x8xf32>, vector<2x8x8xf32> -> vector<2x8x8xf32>
    "tpu.trace_stop"() : () -> ()
    %89 = vector.shape_cast %88 : vector<2x8x8xf32> to vector<16x8xf32>
    %c8 = arith.constant 8 : index
    %c0_30 = arith.constant 0 : index
    %90 = vector.load %arg2[%c8, %c0_30] : memref<32x32xf32, #tpu.memory_space<vmem>>, vector<8x32xf32>
    %cst_31 = arith.constant dense<0.000000e+00> : vector<16x32xf32>
    %91 = tpu.matmul %89, %90, %cst_31 {dimension_numbers = #tpu.dot_dimension_numbers<[1], [0], [0], [1], [0, 0, 1, 1], [], []>} : vector<16x8xf32>, vector<8x32xf32>, vector<16x32xf32> -> vector<16x32xf32>
    %92 = arith.addf %70, %91 : vector<16x32xf32>
    %93 = vector.extract_strided_slice %36 {offsets = [0, 0, 16], sizes = [2, 8, 8], strides = [1, 1, 1]} : vector<2x8x32xf32> to vector<2x8x8xf32>
    %94 = vector.extract_strided_slice %38 {offsets = [0, 0, 16], sizes = [2, 8, 8], strides = [1, 1, 1]} : vector<2x8x32xf32> to vector<2x8x8xf32>
    %95 = vector.extract_strided_slice %40 {offsets = [0, 0, 16], sizes = [2, 8, 8], strides = [1, 1, 1]} : vector<2x8x32xf32> to vector<2x8x8xf32>
    "tpu.trace_start"() <{level = 10 : i32, message = "btd,bsd->bts"}> : () -> ()
    %cst_32 = arith.constant dense<0.000000e+00> : vector<2x8x8xf32>
    %96 = tpu.matmul %93, %94, %cst_32 {dimension_numbers = #tpu.dot_dimension_numbers<[2], [2], [1], [1], [0, 0, 0, 1, 1, 1], [0], [0]>} : vector<2x8x8xf32>, vector<2x8x8xf32>, vector<2x8x8xf32> -> vector<2x8x8xf32>
    "tpu.trace_stop"() : () -> ()
    %97 = vector.shape_cast %46 : vector<8x8xf32> to vector<1x8x8xf32>
    %98 = vector.broadcast %97 : vector<1x8x8xf32> to vector<2x8x8xf32>
    %99 = arith.addf %96, %98 : vector<2x8x8xf32>
    %cst_33 = arith.constant dense<0xFF800000> : vector<2x8xf32>
    %100 = vector.multi_reduction <maximumf>, %99, %cst_33 [2] : vector<2x8x8xf32> to vector<2x8xf32>
    %101 = vector.shape_cast %100 : vector<2x8xf32> to vector<2x8x1xf32>
    %102 = vector.broadcast %101 : vector<2x8x1xf32> to vector<2x8x8xf32>
    %103 = arith.subf %99, %102 : vector<2x8x8xf32>
    %104 = math.exp %103 : vector<2x8x8xf32>
    %cst_34 = arith.constant dense<0.000000e+00> : vector<2x8xf32>
    %105 = vector.multi_reduction <add>, %104, %cst_34 [2] : vector<2x8x8xf32> to vector<2x8xf32>
    %106 = vector.shape_cast %105 : vector<2x8xf32> to vector<2x8x1xf32>
    %107 = tpu.reciprocal %106 : vector<2x8x1xf32> -> vector<2x8x1xf32>
    %108 = vector.broadcast %107 : vector<2x8x1xf32> to vector<2x8x8xf32>
    %109 = arith.mulf %104, %108 : vector<2x8x8xf32>
    "tpu.trace_start"() <{level = 10 : i32, message = "bts,bsd->btd"}> : () -> ()
    %cst_35 = arith.constant dense<0.000000e+00> : vector<2x8x8xf32>
    %110 = tpu.matmul %109, %95, %cst_35 {dimension_numbers = #tpu.dot_dimension_numbers<[2], [1], [1], [2], [0, 0, 0, 1, 1, 2], [0], [0]>} : vector<2x8x8xf32>, vector<2x8x8xf32>, vector<2x8x8xf32> -> vector<2x8x8xf32>
    "tpu.trace_stop"() : () -> ()
    %111 = vector.shape_cast %110 : vector<2x8x8xf32> to vector<16x8xf32>
    %c16 = arith.constant 16 : index
    %c0_36 = arith.constant 0 : index
    %112 = vector.load %arg2[%c16, %c0_36] : memref<32x32xf32, #tpu.memory_space<vmem>>, vector<8x32xf32>
    %cst_37 = arith.constant dense<0.000000e+00> : vector<16x32xf32>
    %113 = tpu.matmul %111, %112, %cst_37 {dimension_numbers = #tpu.dot_dimension_numbers<[1], [0], [0], [1], [0, 0, 1, 1], [], []>} : vector<16x8xf32>, vector<8x32xf32>, vector<16x32xf32> -> vector<16x32xf32>
    %114 = arith.addf %92, %113 : vector<16x32xf32>
    %115 = vector.extract_strided_slice %36 {offsets = [0, 0, 24], sizes = [2, 8, 8], strides = [1, 1, 1]} : vector<2x8x32xf32> to vector<2x8x8xf32>
    %116 = vector.extract_strided_slice %38 {offsets = [0, 0, 24], sizes = [2, 8, 8], strides = [1, 1, 1]} : vector<2x8x32xf32> to vector<2x8x8xf32>
    %117 = vector.extract_strided_slice %40 {offsets = [0, 0, 24], sizes = [2, 8, 8], strides = [1, 1, 1]} : vector<2x8x32xf32> to vector<2x8x8xf32>
    "tpu.trace_start"() <{level = 10 : i32, message = "btd,bsd->bts"}> : () -> ()
    %cst_38 = arith.constant dense<0.000000e+00> : vector<2x8x8xf32>
    %118 = tpu.matmul %115, %116, %cst_38 {dimension_numbers = #tpu.dot_dimension_numbers<[2], [2], [1], [1], [0, 0, 0, 1, 1, 1], [0], [0]>} : vector<2x8x8xf32>, vector<2x8x8xf32>, vector<2x8x8xf32> -> vector<2x8x8xf32>
    "tpu.trace_stop"() : () -> ()
    %119 = vector.shape_cast %46 : vector<8x8xf32> to vector<1x8x8xf32>
    %120 = vector.broadcast %119 : vector<1x8x8xf32> to vector<2x8x8xf32>
    %121 = arith.addf %118, %120 : vector<2x8x8xf32>
    %cst_39 = arith.constant dense<0xFF800000> : vector<2x8xf32>
    %122 = vector.multi_reduction <maximumf>, %121, %cst_39 [2] : vector<2x8x8xf32> to vector<2x8xf32>
    %123 = vector.shape_cast %122 : vector<2x8xf32> to vector<2x8x1xf32>
    %124 = vector.broadcast %123 : vector<2x8x1xf32> to vector<2x8x8xf32>
    %125 = arith.subf %121, %124 : vector<2x8x8xf32>
    %126 = math.exp %125 : vector<2x8x8xf32>
    %cst_40 = arith.constant dense<0.000000e+00> : vector<2x8xf32>
    %127 = vector.multi_reduction <add>, %126, %cst_40 [2] : vector<2x8x8xf32> to vector<2x8xf32>
    %128 = vector.shape_cast %127 : vector<2x8xf32> to vector<2x8x1xf32>
    %129 = tpu.reciprocal %128 : vector<2x8x1xf32> -> vector<2x8x1xf32>
    %130 = vector.broadcast %129 : vector<2x8x1xf32> to vector<2x8x8xf32>
    %131 = arith.mulf %126, %130 : vector<2x8x8xf32>
    "tpu.trace_start"() <{level = 10 : i32, message = "bts,bsd->btd"}> : () -> ()
    %cst_41 = arith.constant dense<0.000000e+00> : vector<2x8x8xf32>
    %132 = tpu.matmul %131, %117, %cst_41 {dimension_numbers = #tpu.dot_dimension_numbers<[2], [1], [1], [2], [0, 0, 0, 1, 1, 2], [0], [0]>} : vector<2x8x8xf32>, vector<2x8x8xf32>, vector<2x8x8xf32> -> vector<2x8x8xf32>
    "tpu.trace_stop"() : () -> ()
    %133 = vector.shape_cast %132 : vector<2x8x8xf32> to vector<16x8xf32>
    %c24 = arith.constant 24 : index
    %c0_42 = arith.constant 0 : index
    %134 = vector.load %arg2[%c24, %c0_42] : memref<32x32xf32, #tpu.memory_space<vmem>>, vector<8x32xf32>
    %cst_43 = arith.constant dense<0.000000e+00> : vector<16x32xf32>
    %135 = tpu.matmul %133, %134, %cst_43 {dimension_numbers = #tpu.dot_dimension_numbers<[1], [0], [0], [1], [0, 0, 1, 1], [], []>} : vector<16x8xf32>, vector<8x32xf32>, vector<16x32xf32> -> vector<16x32xf32>
    %136 = arith.addf %114, %135 : vector<16x32xf32>
    %cst_44 = arith.constant dense<0.000000e+00> : vector<16xf32>
    %137 = vector.multi_reduction <add>, %136, %cst_44 [1] : vector<16x32xf32> to vector<16xf32>
    %138 = vector.shape_cast %137 : vector<16xf32> to vector<16x1xf32>
    %cst_45 = arith.constant 3.200000e+01 : f32
    %139 = vector.broadcast %cst_45 : f32 to vector<16x1xf32>
    %140 = arith.divf %138, %139 : vector<16x1xf32>
    %141 = vector.broadcast %140 : vector<16x1xf32> to vector<16x32xf32>
    %142 = arith.subf %136, %141 : vector<16x32xf32>
    %143 = arith.mulf %142, %142 : vector<16x32xf32>
    %cst_46 = arith.constant dense<0.000000e+00> : vector<16xf32>
    %144 = vector.multi_reduction <add>, %143, %cst_46 [1] : vector<16x32xf32> to vector<16xf32>
    %145 = vector.shape_cast %144 : vector<16xf32> to vector<16x1xf32>
    %cst_47 = arith.constant 3.200000e+01 : f32
    %146 = vector.broadcast %cst_47 : f32 to vector<16x1xf32>
    %147 = arith.divf %145, %146 : vector<16x1xf32>
    %148 = vector.broadcast %140 : vector<16x1xf32> to vector<16x32xf32>
    %149 = arith.subf %136, %148 : vector<16x32xf32>
    %cst_48 = arith.constant 9.99999974E-6 : f32
    %150 = vector.broadcast %cst_48 : f32 to vector<16x1xf32>
    %151 = arith.addf %147, %150 : vector<16x1xf32>
    %152 = math.rsqrt %151 : vector<16x1xf32>
    %153 = vector.broadcast %152 : vector<16x1xf32> to vector<16x32xf32>
    %154 = arith.mulf %149, %153 : vector<16x32xf32>
    %155 = vector.broadcast %5 : vector<1x32xf32> to vector<16x32xf32>
    %156 = arith.mulf %155, %154 : vector<16x32xf32>
    %157 = vector.broadcast %6 : vector<1x32xf32> to vector<16x32xf32>
    %158 = arith.addf %156, %157 : vector<16x32xf32>
    %c0_49 = arith.constant 0 : index
    %c0_50 = arith.constant 0 : index
    %159 = vector.load %arg3[%c0_49, %c0_50] : memref<32x128xf32, #tpu.memory_space<vmem>>, vector<32x128xf32>
    %cst_51 = arith.constant dense<0.000000e+00> : vector<16x128xf32>
    %160 = tpu.matmul %158, %159, %cst_51 {dimension_numbers = #tpu.dot_dimension_numbers<[1], [0], [0], [1], [0, 0, 1, 1], [], []>} : vector<16x32xf32>, vector<32x128xf32>, vector<16x128xf32> -> vector<16x128xf32>
    %161 = vector.broadcast %7 : vector<1x128xf32> to vector<16x128xf32>
    %162 = arith.addf %160, %161 : vector<16x128xf32>
    %cst_52 = arith.constant 0.636619746 : f32
    %163 = math.sqrt %cst_52 : f32
    %cst_53 = arith.constant 5.000000e-01 : f32
    %164 = vector.broadcast %cst_53 : f32 to vector<16x128xf32>
    %165 = arith.mulf %164, %162 : vector<16x128xf32>
    %cst_54 = arith.constant 4.471500e-02 : f32
    %166 = vector.broadcast %cst_54 : f32 to vector<16x128xf32>
    %167 = arith.mulf %166, %162 : vector<16x128xf32>
    %168 = arith.mulf %167, %162 : vector<16x128xf32>
    %169 = arith.mulf %168, %162 : vector<16x128xf32>
    %170 = arith.addf %162, %169 : vector<16x128xf32>
    %171 = vector.broadcast %163 : f32 to vector<16x128xf32>
    %172 = arith.mulf %171, %170 : vector<16x128xf32>
    %173 = math.tanh %172 : vector<16x128xf32>
    %cst_55 = arith.constant 1.000000e+00 : f32
    %174 = vector.broadcast %cst_55 : f32 to vector<16x128xf32>
    %175 = arith.addf %174, %173 : vector<16x128xf32>
    %176 = arith.mulf %165, %175 : vector<16x128xf32>
    %c0_56 = arith.constant 0 : index
    %c0_57 = arith.constant 0 : index
    %177 = vector.load %arg4[%c0_56, %c0_57] : memref<128x32xf32, #tpu.memory_space<vmem>>, vector<128x32xf32>
    %cst_58 = arith.constant dense<0.000000e+00> : vector<16x32xf32>
    %178 = tpu.matmul %176, %177, %cst_58 {dimension_numbers = #tpu.dot_dimension_numbers<[1], [0], [0], [1], [0, 0, 1, 1], [], []>} : vector<16x128xf32>, vector<128x32xf32>, vector<16x32xf32> -> vector<16x32xf32>
    %179 = vector.broadcast %8 : vector<1x32xf32> to vector<16x32xf32>
    %180 = arith.addf %178, %179 : vector<16x32xf32>
    %181 = arith.addf %180, %136 : vector<16x32xf32>
    %c0_59 = arith.constant 0 : index
    %c0_60 = arith.constant 0 : index
    %182 = vector.load %arg6[%c0_59, %c0_60] : memref<16x32xf32, #tpu.memory_space<vmem>>, vector<16x32xf32>
    tpu.vector_store %arg6[%c0_59, %c0_60], %181 {strides = array<i32>} : memref<16x32xf32, #tpu.memory_space<vmem>>, vector<16x32xf32>,
    return
  }
}

</mosaic_0001>

<llo_original>
// kernel: tpu_custom_call.1
$region0: #{tpu_custom_call.1}
  #allocation0 [shape = 'u32[]', space=smem, size = 0x4, offset = 0x4, fixed_abs, tag = 'smem constant byte address 0x4 - core index']
  #allocation1 [shape = 'u32[72,128]{1,0:T(1,128)}', space=vmem, size = 0x9000, scoped, tag = 'internal scratch']
  %s0 = inlined_call_operand.vmem [shape: f32[16,32], index: 0, kind: input, shape index: {}]
  %s1 = inlined_call_operand.vmem [shape: f32[32,96], index: 1, kind: input, shape index: {}]
  %s2 = inlined_call_operand.vmem [shape: f32[32,32], index: 2, kind: input, shape index: {}]
  %s3 = inlined_call_operand.vmem [shape: f32[32,128], index: 3, kind: input, shape index: {}]
  %s4 = inlined_call_operand.vmem [shape: f32[128,32], index: 4, kind: input, shape index: {}]
  %s5 = inlined_call_operand.vmem [shape: f32[8,128], index: 5, kind: input, shape index: {}]
  %s6 = inlined_call_operand.hbm [shape: f32[16,32], index: 6, kind: output, shape index: {}]
  %s7 = sld [smem:[#allocation0]]
  $region34: #{tpu_custom_call.1} parent=0
    _
  %s9 = ssub.s32 1, %s7
  %s10 = scalar_select 0, %s9, %s7
  $region1: #{tpu_custom_call.1} parent=0
    #allocation2 [shape = 'u8[8192]{0}', space=vmem, size = 0x2000, scoped, tag = 'output window, operand 0, single buffered']
    #allocation3 [shape = 's32[1]{0}', space=sflag, size = 0x4, scoped, tag = 'scoped memory for tpu_custom_call.1']
    %11 = vsyncpa [#allocation3], 0
    // Predicated region
    $region2: #{tpu_custom_call.1} parent=1 // pred_check
      _
    $region3: #{tpu_custom_call.1} parent=1 // pred_check_branch
      %13 = sbr.rel (0) target = $region5
    $region4: #{tpu_custom_call.1} parent=1 // pred_region
      _
    $region5: #{tpu_custom_call.1} parent=1 // pred_fallthru
      _
    // Predicated region
    $region6: #{tpu_custom_call.1} parent=1 // pred_check
      _
    $region7: #{tpu_custom_call.1} parent=1 // pred_check_branch
      %15 = sbr.rel (0) target = $region9
    $region8: #{tpu_custom_call.1} parent=1 // pred_region
      _
    $region9: #{tpu_custom_call.1} parent=1 // pred_fallthru
      _
    // Predicated region
    $region10: #{tpu_custom_call.1} parent=1 // pred_check
      _
    $region11: #{tpu_custom_call.1} parent=1 // pred_check_branch
      %17 = sbr.rel (0) target = $region13
    $region12: #{tpu_custom_call.1} parent=1 // pred_region
      _
    $region13: #{tpu_custom_call.1} parent=1 // pred_fallthru
      _
    // Predicated region
    $region14: #{tpu_custom_call.1} parent=1 // pred_check
      _
    $region15: #{tpu_custom_call.1} parent=1 // pred_check_branch
      %19 = sbr.rel (0) target = $region17
    $region16: #{tpu_custom_call.1} parent=1 // pred_region
      _
    $region17: #{tpu_custom_call.1} parent=1 // pred_fallthru
      _
    // Predicated region
    $region18: #{tpu_custom_call.1} parent=1 // pred_check
      _
    $region19: #{tpu_custom_call.1} parent=1 // pred_check_branch
      %21 = sbr.rel (0) target = $region21
    $region20: #{tpu_custom_call.1} parent=1 // pred_region
      _
    $region21: #{tpu_custom_call.1} parent=1 // pred_fallthru
      _
    // Predicated region
    $region22: #{tpu_custom_call.1} parent=1 // pred_check
      _
    $region23: #{tpu_custom_call.1} parent=1 // pred_check_branch
      %23 = sbr.rel (0) target = $region25
    $region24: #{tpu_custom_call.1} parent=1 // pred_region
      _
    $region25: #{tpu_custom_call.1} parent=1 // pred_fallthru
      _
    %v24 = vld [vmem:[%s0] sm:$0xff]
    %v25 = vld [vmem:[%s0 + $0x8] sm:$0xff]
    %v26 = vld [vmem:[%s5] sm:$0x1]
    %v27 = vld [vmem:[%s5 + $0x1] sm:$0x1]
    %v28 = vld [vmem:[%s5 + $0x2] sm:$0x1]
    %v29 = vld [vmem:[%s5 + $0x3] sm:$0x1]
    %v30 = vld [vmem:[%s5 + $0x4] sm:$0x1]
    %v31 = vld [vmem:[%s5 + $0x5] sm:$0x1]
    %v32 = vld [vmem:[%s5 + $0x6] sm:$0x1]
    %v33 = vld [vmem:[%s5 + $0x7] sm:$0x1]
    %vm34 = vcmask 261120
    %v35 = vsel %vm34, %v24, 0.0
    %36 = vadd.xlane.f32.xlu0 %v35
    %v37 = vpop.xlane.xlu0 %36
    %v38 = vsel %vm34, %v25, 0.0
    %39 = vadd.xlane.f32.xlu0 %v38
    %v40 = vpop.xlane.xlu0 %39
    %v41 = vrcp.pop 32.0
    %v42 = vmul.f32 32.0, %v41
    %v43 = vsub.f32 1.0, %v42
    %v44 = vmul.f32 %v41, %v43
    %v45 = vadd.f32 %v41, %v44
    %vm46 = vweird.f32 %v41
    %v47 = vsel %vm46, %v41, %v45
    %v48 = vmul.f32 %v37, %v47
    %v49 = vmul.f32 %v40, %v47
    %v50 = vsub.f32 %v24, %v48
    %v51 = vsub.f32 %v25, %v49
    %v52 = vmul.f32 %v50, %v50
    %v53 = vmul.f32 %v51, %v51
    %v54 = vsel %vm34, %v52, 0.0
    %55 = vadd.xlane.f32.xlu0 %v54
    %v56 = vpop.xlane.xlu0 %55
    %v57 = vsel %vm34, %v53, 0.0
    %58 = vadd.xlane.f32.xlu0 %v57
    %v59 = vpop.xlane.xlu0 %58
    %v60 = vmul.f32 %v56, %v47
    %v61 = vmul.f32 %v59, %v47
    %v62 = vadd.f32 %v60, 1e-05
    %v63 = vadd.f32 %v61, 1e-05
    %v64 = vrsqrt.pop %v62
    %v65 = vmul.f32 %v64, %v62
    %v66 = vmul.f32 %v65, %v64
    %v67 = vmul.f32 0.5, %v66
    %v68 = vsub.f32 1.5, %v67
    %v69 = vmul.f32 %v64, %v68
    %vm70 = vweird.f32 %v62
    %vm71 = vweird.f32 %v64
    %vm72 = vmor %vm70, %vm71
    %v73 = vsel %vm72, %v64, %v69
    %v74 = vrsqrt.pop %v63
    %v75 = vmul.f32 %v74, %v63
    %v76 = vmul.f32 %v75, %v74
    %v77 = vmul.f32 0.5, %v76
    %v78 = vsub.f32 1.5, %v77
    %v79 = vmul.f32 %v74, %v78
    %vm80 = vweird.f32 %v63
    %vm81 = vweird.f32 %v74
    %vm82 = vmor %vm80, %vm81
    %v83 = vsel %vm82, %v74, %v79
    %v84 = vmul.f32 %v50, %v73
    %v85 = vmul.f32 %v51, %v83
    %v86 = vperm.slane %v28, 0
    %v87 = vmul.f32 %v86, %v84
    %v88 = vmul.f32 %v86, %v85
    %v89 = vperm.slane %v29, 0
    %v90 = vadd.f32 %v87, %v89
    %v91 = vadd.f32 %v88, %v89
    %v92 = vld [vmem:[%s1] sm:$0xff]
    %v93 = vld [vmem:[%s1 + $0x8] sm:$0xff]
    %v94 = vld [vmem:[%s1 + $0x10] sm:$0xff]
    %v95 = vld [vmem:[%s1 + $0x18] sm:$0xff]
    %v96 = vperm.slane %v26, 0
    %v98 = vsel %vm34, %v90, 0
    %v101 = vsel %vm34, %v91, 0
    %103 = vmatpush.msra.mxu0 0.0
    %104 = vmatpush.msra.mxu0 0.0
    %105 = vmatpush.msra.mxu0 0.0
    %106 = vmatpush.msra.mxu0 0.0
    %107 = vmatpush.msra.mxu0 0.0
    %108 = vmatpush.msra.mxu0 0.0
    %109 = vmatpush.msra.mxu0 0.0
    %110 = vmatpush.msra.mxu0 0.0
    %111 = vmatpush.msra.mxu0 0.0
    %112 = vmatpush.msra.mxu0 0.0
    %113 = vmatpush.msra.mxu0 0.0
    %114 = vmatpush.msra.mxu0 0.0
    %115 = vmatpush.msra.mxu0 %v95
    %116 = vmatpush.msra.mxu0 %v94
    %117 = vmatpush.msra.mxu0 %v93
    %118 = vmatpush.msra.mxu0 %v92
    %119 = vmatmul.f32.gmra.mxu0 %v98
    %v120 = vpop.f32.mrf.mxu0
    %v121 = vadd.f32 %v96, %v120
    %122 = vmatmul.f32.gmra.mxu0 %v101
    %v123 = vpop.f32.mrf.mxu0
    %v124 = vadd.f32 %v96, %v123
    %125 = vdwg.mxu0
    %v126 = vlaneseq
    %v127 = vshrl.u32 %v126, 7
    %v128 = vlaneseq
    %v129 = vand.u32 %v128, 127
    %vm130 = vcmp.gt.s32.totalorder %v129, %v127
    %v131 = vsel %vm130, -1e+30, 0.0
    %v132 = vperm.slane %v27, 0
    %v133 = vadd.f32 %v24, %v132
    %v134 = vadd.f32 %v25, %v132
    %136 = vrot.lane.b32.xlu0 %v121, 96
    %v137 = vpop.permute.xlu0 %136
    %vm138 = vcmask 64512
    %v139 = vsel %vm138, %v121, 0
    %v141 = vsel %vm138, %v137, 0
    %143 = vmatpush.xpose.msra.mxu0 0.0
    %144 = vmatpush.xpose.msra.mxu0 0.0
    %145 = vmatpush.xpose.msra.mxu0 0.0
    %146 = vmatpush.xpose.msra.mxu0 0.0
    %147 = vmatpush.xpose.msra.mxu0 0.0
    %148 = vmatpush.xpose.msra.mxu0 0.0
    %149 = vmatpush.xpose.msra.mxu0 0.0
    %150 = vmatpush.xpose.msra.mxu0 0.0
    %151 = vmatpush.xpose.msra.mxu0 0.0
    %152 = vmatpush.xpose.msra.mxu0 0.0
    %153 = vmatpush.xpose.msra.mxu0 0.0
    %154 = vmatpush.xpose.msra.mxu0 0.0
    %155 = vmatpush.xpose.msra.mxu0 0.0
    %156 = vmatpush.xpose.msra.mxu0 0.0
    %157 = vmatpush.xpose.msra.mxu0 0.0
    %158 = vmatpush.xpose.msra.mxu0 %v141
    %159 = vmatmul.f32.gmra.mxu0 %v139
    %v160 = vpop.f32.mrf.mxu0
    %v161 = vadd.f32 %v131, %v160
    %162 = vdwg.mxu0
    %164 = vrot.lane.b32.xlu0 %v124, 96
    %v165 = vpop.permute.xlu0 %164
    %v166 = vsel %vm138, %v124, 0
    %v168 = vsel %vm138, %v165, 0
    %170 = vmatpush.xpose.msra.mxu0 0.0
    %171 = vmatpush.xpose.msra.mxu0 0.0
    %172 = vmatpush.xpose.msra.mxu0 0.0
    %173 = vmatpush.xpose.msra.mxu0 0.0
    %174 = vmatpush.xpose.msra.mxu0 0.0
    %175 = vmatpush.xpose.msra.mxu0 0.0
    %176 = vmatpush.xpose.msra.mxu0 0.0
    %177 = vmatpush.xpose.msra.mxu0 0.0
    %178 = vmatpush.xpose.msra.mxu0 0.0
    %179 = vmatpush.xpose.msra.mxu0 0.0
    %180 = vmatpush.xpose.msra.mxu0 0.0
    %181 = vmatpush.xpose.msra.mxu0 0.0
    %182 = vmatpush.xpose.msra.mxu0 0.0
    %183 = vmatpush.xpose.msra.mxu0 0.0
    %184 = vmatpush.xpose.msra.mxu0 0.0
    %185 = vmatpush.xpose.msra.mxu0 %v168
    %186 = vmatmul.f32.gmra.mxu0 %v166
    %v187 = vpop.f32.mrf.mxu0
    %v188 = vadd.f32 %v131, %v187
    %189 = vdwg.mxu0
    %v190 = vsel %vm138, %v161, -inf
    %191 = vmax.xlane.f32.xlu0 %v190
    %v192 = vpop.xlane.xlu0 %191
    %v193 = vsel %vm138, %v188, -inf
    %194 = vmax.xlane.f32.xlu0 %v193
    %v195 = vpop.xlane.xlu0 %194
    %v196 = vsub.f32 %v161, %v192
    %v197 = vsub.f32 %v188, %v195
    %v198 = vmul.f32 %v196, 1.442695
    %v199 = vpow.pop %v198
    %v200 = vmul.f32 %v197, 1.442695
    %v201 = vpow.pop %v200
    %v202 = vsel %vm138, %v199, 0.0
    %203 = vadd.xlane.f32.xlu0 %v202
    %v204 = vpop.xlane.xlu0 %203
    %v205 = vsel %vm138, %v201, 0.0
    %206 = vadd.xlane.f32.xlu0 %v205
    %v207 = vpop.xlane.xlu0 %206
    %v208 = vrcp.pop %v204
    %v209 = vmul.f32 %v204, %v208
    %v210 = vsub.f32 1.0, %v209
    %v211 = vmul.f32 %v208, %v210
    %v212 = vadd.f32 %v208, %v211
    %vm213 = vweird.f32 %v204
    %vm214 = vweird.f32 %v208
    %vm215 = vmor %vm213, %vm214
    %v216 = vsel %vm215, %v208, %v212
    %v217 = vand.u32 2147483647, %v204
    %vm218 = vcmp.eq.f32.partialorder %v217, 8.507059e+37
    %v219 = vand.u32 %v204, 2147483648
    %v220 = vor.u32 1.1754944e-38, %v219
    %v221 = vsel %vm218, %v220, %v216
    %v222 = vrcp.pop %v207
    %v223 = vmul.f32 %v207, %v222
    %v224 = vsub.f32 1.0, %v223
    %v225 = vmul.f32 %v222, %v224
    %v226 = vadd.f32 %v222, %v225
    %vm227 = vweird.f32 %v207
    %vm228 = vweird.f32 %v222
    %vm229 = vmor %vm227, %vm228
    %v230 = vsel %vm229, %v222, %v226
    %v231 = vand.u32 2147483647, %v207
    %vm232 = vcmp.eq.f32.partialorder %v231, 8.507059e+37
    %v233 = vand.u32 %v207, 2147483648
    %v234 = vor.u32 1.1754944e-38, %v233
    %v235 = vsel %vm232, %v234, %v230
    %v236 = vmul.f32 %v199, %v221
    %v237 = vmul.f32 %v201, %v235
    %238 = vrot.lane.b32.xlu0 %v121, 64
    %v239 = vpop.permute.xlu0 %238
    %v242 = vsel %vm138, %v236, 0
    %244 = vmatpush.msra.mxu0 0.0
    %245 = vmatpush.msra.mxu0 0.0
    %246 = vmatpush.msra.mxu0 0.0
    %247 = vmatpush.msra.mxu0 0.0
    %248 = vmatpush.msra.mxu0 0.0
    %249 = vmatpush.msra.mxu0 0.0
    %250 = vmatpush.msra.mxu0 0.0
    %251 = vmatpush.msra.mxu0 0.0
    %252 = vmatpush.msra.mxu0 0.0
    %253 = vmatpush.msra.mxu0 0.0
    %254 = vmatpush.msra.mxu0 0.0
    %255 = vmatpush.msra.mxu0 0.0
    %256 = vmatpush.msra.mxu0 0.0
    %257 = vmatpush.msra.mxu0 0.0
    %258 = vmatpush.msra.mxu0 0.0
    %259 = vmatpush.msra.mxu0 %v239
    %260 = vmatmul.f32.gmra.mxu0 %v242
    %v261 = vpop.f32.mrf.mxu0
    %v262 = vadd.f32 0.0, %v261
    %263 = vdwg.mxu0
    %264 = vrot.lane.b32.xlu0 %v124, 64
    %v265 = vpop.permute.xlu0 %264
    %v268 = vsel %vm138, %v237, 0
    %270 = vmatpush.msra.mxu0 0.0
    %271 = vmatpush.msra.mxu0 0.0
    %272 = vmatpush.msra.mxu0 0.0
    %273 = vmatpush.msra.mxu0 0.0
    %274 = vmatpush.msra.mxu0 0.0
    %275 = vmatpush.msra.mxu0 0.0
    %276 = vmatpush.msra.mxu0 0.0
    %277 = vmatpush.msra.mxu0 0.0
    %278 = vmatpush.msra.mxu0 0.0
    %279 = vmatpush.msra.mxu0 0.0
    %280 = vmatpush.msra.mxu0 0.0
    %281 = vmatpush.msra.mxu0 0.0
    %282 = vmatpush.msra.mxu0 0.0
    %283 = vmatpush.msra.mxu0 0.0
    %284 = vmatpush.msra.mxu0 0.0
    %285 = vmatpush.msra.mxu0 %v265
    %286 = vmatmul.f32.gmra.mxu0 %v268
    %v287 = vpop.f32.mrf.mxu0
    %v288 = vadd.f32 0.0, %v287
    %289 = vdwg.mxu0
    %v290 = vld [vmem:[%s2] sm:$0xff]
    %v292 = vsel %vm138, %v262, 0
    %v295 = vsel %vm138, %v288, 0
    %297 = vmatpush.msra.mxu0 0.0
    %298 = vmatpush.msra.mxu0 0.0
    %299 = vmatpush.msra.mxu0 0.0
    %300 = vmatpush.msra.mxu0 0.0
    %301 = vmatpush.msra.mxu0 0.0
    %302 = vmatpush.msra.mxu0 0.0
    %303 = vmatpush.msra.mxu0 0.0
    %304 = vmatpush.msra.mxu0 0.0
    %305 = vmatpush.msra.mxu0 0.0
    %306 = vmatpush.msra.mxu0 0.0
    %307 = vmatpush.msra.mxu0 0.0
    %308 = vmatpush.msra.mxu0 0.0
    %309 = vmatpush.msra.mxu0 0.0
    %310 = vmatpush.msra.mxu0 0.0
    %311 = vmatpush.msra.mxu0 0.0
    %312 = vmatpush.msra.mxu0 %v290
    %313 = vmatmul.f32.gmra.mxu0 %v292
    %v314 = vpop.f32.mrf.mxu0
    %v315 = vadd.f32 0.0, %v314
    %316 = vmatmul.f32.gmra.mxu0 %v295
    %v317 = vpop.f32.mrf.mxu0
    %v318 = vadd.f32 0.0, %v317
    %319 = vdwg.mxu0
    %v320 = vadd.f32 %v133, %v315
    %v321 = vadd.f32 %v134, %v318
    %322 = vrot.lane.b32.xlu0 %v121, 120
    %v323 = vpop.permute.xlu0 %322
    %324 = vrot.lane.b32.xlu0 %v121, 88
    %v325 = vpop.permute.xlu0 %324
    %v326 = vsel %vm138, %v323, 0
    %v328 = vsel %vm138, %v325, 0
    %330 = vmatpush.xpose.msra.mxu0 0.0
    %331 = vmatpush.xpose.msra.mxu0 0.0
    %332 = vmatpush.xpose.msra.mxu0 0.0
    %333 = vmatpush.xpose.msra.mxu0 0.0
    %334 = vmatpush.xpose.msra.mxu0 0.0
    %335 = vmatpush.xpose.msra.mxu0 0.0
    %336 = vmatpush.xpose.msra.mxu0 0.0
    %337 = vmatpush.xpose.msra.mxu0 0.0
    %338 = vmatpush.xpose.msra.mxu0 0.0
    %339 = vmatpush.xpose.msra.mxu0 0.0
    %340 = vmatpush.xpose.msra.mxu0 0.0
    %341 = vmatpush.xpose.msra.mxu0 0.0
    %342 = vmatpush.xpose.msra.mxu0 0.0
    %343 = vmatpush.xpose.msra.mxu0 0.0
    %344 = vmatpush.xpose.msra.mxu0 0.0
    %345 = vmatpush.xpose.msra.mxu0 %v328
    %346 = vmatmul.f32.gmra.mxu0 %v326
    %v347 = vpop.f32.mrf.mxu0
    %v348 = vadd.f32 %v131, %v347
    %349 = vdwg.mxu0
    %350 = vrot.lane.b32.xlu0 %v124, 120
    %v351 = vpop.permute.xlu0 %350
    %352 = vrot.lane.b32.xlu0 %v124, 88
    %v353 = vpop.permute.xlu0 %352
    %v354 = vsel %vm138, %v351, 0
    %v356 = vsel %vm138, %v353, 0
    %358 = vmatpush.xpose.msra.mxu0 0.0
    %359 = vmatpush.xpose.msra.mxu0 0.0
    %360 = vmatpush.xpose.msra.mxu0 0.0
    %361 = vmatpush.xpose.msra.mxu0 0.0
    %362 = vmatpush.xpose.msra.mxu0 0.0
    %363 = vmatpush.xpose.msra.mxu0 0.0
    %364 = vmatpush.xpose.msra.mxu0 0.0
    %365 = vmatpush.xpose.msra.mxu0 0.0
    %366 = vmatpush.xpose.msra.mxu0 0.0
    %367 = vmatpush.xpose.msra.mxu0 0.0
    %368 = vmatpush.xpose.msra.mxu0 0.0
    %369 = vmatpush.xpose.msra.mxu0 0.0
    %370 = vmatpush.xpose.msra.mxu0 0.0
    %371 = vmatpush.xpose.msra.mxu0 0.0
    %372 = vmatpush.xpose.msra.mxu0 0.0
    %373 = vmatpush.xpose.msra.mxu0 %v356
    %374 = vmatmul.f32.gmra.mxu0 %v354
    %v375 = vpop.f32.mrf.mxu0
    %v376 = vadd.f32 %v131, %v375
    %377 = vdwg.mxu0
    %v378 = vsel %vm138, %v348, -inf
    %379 = vmax.xlane.f32.xlu0 %v378
    %v380 = vpop.xlane.xlu0 %379
    %v381 = vsel %vm138, %v376, -inf
    %382 = vmax.xlane.f32.xlu0 %v381
    %v383 = vpop.xlane.xlu0 %382
    %v384 = vsub.f32 %v348, %v380
    %v385 = vsub.f32 %v376, %v383
    %v386 = vmul.f32 %v384, 1.442695
    %v387 = vpow.pop %v386
    %v388 = vmul.f32 %v385, 1.442695
    %v389 = vpow.pop %v388
    %v390 = vsel %vm138, %v387, 0.0
    %391 = vadd.xlane.f32.xlu0 %v390
    %v392 = vpop.xlane.xlu0 %391
    %v393 = vsel %vm138, %v389, 0.0
    %394 = vadd.xlane.f32.xlu0 %v393
    %v395 = vpop.xlane.xlu0 %394
    %v396 = vrcp.pop %v392
    %v397 = vmul.f32 %v392, %v396
    %v398 = vsub.f32 1.0, %v397
    %v399 = vmul.f32 %v396, %v398
    %v400 = vadd.f32 %v396, %v399
    %vm401 = vweird.f32 %v392
    %vm402 = vweird.f32 %v396
    %vm403 = vmor %vm401, %vm402
    %v404 = vsel %vm403, %v396, %v400
    %v405 = vand.u32 2147483647, %v392
    %vm406 = vcmp.eq.f32.partialorder %v405, 8.507059e+37
    %v407 = vand.u32 %v392, 2147483648
    %v408 = vor.u32 1.1754944e-38, %v407
    %v409 = vsel %vm406, %v408, %v404
    %v410 = vrcp.pop %v395
    %v411 = vmul.f32 %v395, %v410
    %v412 = vsub.f32 1.0, %v411
    %v413 = vmul.f32 %v410, %v412
    %v414 = vadd.f32 %v410, %v413
    %vm415 = vweird.f32 %v395
    %vm416 = vweird.f32 %v410
    %vm417 = vmor %vm415, %vm416
    %v418 = vsel %vm417, %v410, %v414
    %v419 = vand.u32 2147483647, %v395
    %vm420 = vcmp.eq.f32.partialorder %v419, 8.507059e+37
    %v421 = vand.u32 %v395, 2147483648
    %v422 = vor.u32 1.1754944e-38, %v421
    %v423 = vsel %vm420, %v422, %v418
    %v424 = vmul.f32 %v387, %v409
    %v425 = vmul.f32 %v389, %v423
    %426 = vrot.lane.b32.xlu0 %v121, 56
    %v427 = vpop.permute.xlu0 %426
    %v430 = vsel %vm138, %v424, 0
    %432 = vmatpush.msra.mxu0 0.0
    %433 = vmatpush.msra.mxu0 0.0
    %434 = vmatpush.msra.mxu0 0.0
    %435 = vmatpush.msra.mxu0 0.0
    %436 = vmatpush.msra.mxu0 0.0
    %437 = vmatpush.msra.mxu0 0.0
    %438 = vmatpush.msra.mxu0 0.0
    %439 = vmatpush.msra.mxu0 0.0
    %440 = vmatpush.msra.mxu0 0.0
    %441 = vmatpush.msra.mxu0 0.0
    %442 = vmatpush.msra.mxu0 0.0
    %443 = vmatpush.msra.mxu0 0.0
    %444 = vmatpush.msra.mxu0 0.0
    %445 = vmatpush.msra.mxu0 0.0
    %446 = vmatpush.msra.mxu0 0.0
    %447 = vmatpush.msra.mxu0 %v427
    %448 = vmatmul.f32.gmra.mxu0 %v430
    %v449 = vpop.f32.mrf.mxu0
    %v450 = vadd.f32 0.0, %v449
    %451 = vdwg.mxu0
    %452 = vrot.lane.b32.xlu0 %v124, 56
    %v453 = vpop.permute.xlu0 %452
    %v456 = vsel %vm138, %v425, 0
    %458 = vmatpush.msra.mxu0 0.0
    %459 = vmatpush.msra.mxu0 0.0
    %460 = vmatpush.msra.mxu0 0.0
    %461 = vmatpush.msra.mxu0 0.0
    %462 = vmatpush.msra.mxu0 0.0
    %463 = vmatpush.msra.mxu0 0.0
    %464 = vmatpush.msra.mxu0 0.0
    %465 = vmatpush.msra.mxu0 0.0
    %466 = vmatpush.msra.mxu0 0.0
    %467 = vmatpush.msra.mxu0 0.0
    %468 = vmatpush.msra.mxu0 0.0
    %469 = vmatpush.msra.mxu0 0.0
    %470 = vmatpush.msra.mxu0 0.0
    %471 = vmatpush.msra.mxu0 0.0
    %472 = vmatpush.msra.mxu0 0.0
    %473 = vmatpush.msra.mxu0 %v453
    %474 = vmatmul.f32.gmra.mxu0 %v456
    %v475 = vpop.f32.mrf.mxu0
    %v476 = vadd.f32 0.0, %v475
    %477 = vdwg.mxu0
    %v478 = vld [vmem:[%s2 + $0x8] sm:$0xff]
    %v480 = vsel %vm138, %v450, 0
    %v483 = vsel %vm138, %v476, 0
    %485 = vmatpush.msra.mxu0 0.0
    %486 = vmatpush.msra.mxu0 0.0
    %487 = vmatpush.msra.mxu0 0.0
    %488 = vmatpush.msra.mxu0 0.0
    %489 = vmatpush.msra.mxu0 0.0
    %490 = vmatpush.msra.mxu0 0.0
    %491 = vmatpush.msra.mxu0 0.0
    %492 = vmatpush.msra.mxu0 0.0
    %493 = vmatpush.msra.mxu0 0.0
    %494 = vmatpush.msra.mxu0 0.0
    %495 = vmatpush.msra.mxu0 0.0
    %496 = vmatpush.msra.mxu0 0.0
    %497 = vmatpush.msra.mxu0 0.0
    %498 = vmatpush.msra.mxu0 0.0
    %499 = vmatpush.msra.mxu0 0.0
    %500 = vmatpush.msra.mxu0 %v478
    %501 = vmatmul.f32.gmra.mxu0 %v480
    %v502 = vpop.f32.mrf.mxu0
    %v503 = vadd.f32 0.0, %v502
    %504 = vmatmul.f32.gmra.mxu0 %v483
    %v505 = vpop.f32.mrf.mxu0
    %v506 = vadd.f32 0.0, %v505
    %507 = vdwg.mxu0
    %v508 = vadd.f32 %v320, %v503
    %v509 = vadd.f32 %v321, %v506
    %510 = vrot.lane.b32.xlu0 %v121, 112
    %v511 = vpop.permute.xlu0 %510
    %512 = vrot.lane.b32.xlu0 %v121, 80
    %v513 = vpop.permute.xlu0 %512
    %v514 = vsel %vm138, %v511, 0
    %v516 = vsel %vm138, %v513, 0
    %518 = vmatpush.xpose.msra.mxu0 0.0
    %519 = vmatpush.xpose.msra.mxu0 0.0
    %520 = vmatpush.xpose.msra.mxu0 0.0
    %521 = vmatpush.xpose.msra.mxu0 0.0
    %522 = vmatpush.xpose.msra.mxu0 0.0
    %523 = vmatpush.xpose.msra.mxu0 0.0
    %524 = vmatpush.xpose.msra.mxu0 0.0
    %525 = vmatpush.xpose.msra.mxu0 0.0
    %526 = vmatpush.xpose.msra.mxu0 0.0
    %527 = vmatpush.xpose.msra.mxu0 0.0
    %528 = vmatpush.xpose.msra.mxu0 0.0
    %529 = vmatpush.xpose.msra.mxu0 0.0
    %530 = vmatpush.xpose.msra.mxu0 0.0
    %531 = vmatpush.xpose.msra.mxu0 0.0
    %532 = vmatpush.xpose.msra.mxu0 0.0
    %533 = vmatpush.xpose.msra.mxu0 %v516
    %534 = vmatmul.f32.gmra.mxu0 %v514
    %v535 = vpop.f32.mrf.mxu0
    %v536 = vadd.f32 %v131, %v535
    %537 = vdwg.mxu0
    %538 = vrot.lane.b32.xlu0 %v124, 112
    %v539 = vpop.permute.xlu0 %538
    %540 = vrot.lane.b32.xlu0 %v124, 80
    %v541 = vpop.permute.xlu0 %540
    %v542 = vsel %vm138, %v539, 0
    %v544 = vsel %vm138, %v541, 0
    %546 = vmatpush.xpose.msra.mxu0 0.0
    %547 = vmatpush.xpose.msra.mxu0 0.0
    %548 = vmatpush.xpose.msra.mxu0 0.0
    %549 = vmatpush.xpose.msra.mxu0 0.0
    %550 = vmatpush.xpose.msra.mxu0 0.0
    %551 = vmatpush.xpose.msra.mxu0 0.0
    %552 = vmatpush.xpose.msra.mxu0 0.0
    %553 = vmatpush.xpose.msra.mxu0 0.0
    %554 = vmatpush.xpose.msra.mxu0 0.0
    %555 = vmatpush.xpose.msra.mxu0 0.0
    %556 = vmatpush.xpose.msra.mxu0 0.0
    %557 = vmatpush.xpose.msra.mxu0 0.0
    %558 = vmatpush.xpose.msra.mxu0 0.0
    %559 = vmatpush.xpose.msra.mxu0 0.0
    %560 = vmatpush.xpose.msra.mxu0 0.0
    %561 = vmatpush.xpose.msra.mxu0 %v544
    %562 = vmatmul.f32.gmra.mxu0 %v542
    %v563 = vpop.f32.mrf.mxu0
    %v564 = vadd.f32 %v131, %v563
    %565 = vdwg.mxu0
    %v566 = vsel %vm138, %v536, -inf
    %567 = vmax.xlane.f32.xlu0 %v566
    %v568 = vpop.xlane.xlu0 %567
    %v569 = vsel %vm138, %v564, -inf
    %570 = vmax.xlane.f32.xlu0 %v569
    %v571 = vpop.xlane.xlu0 %570
    %v572 = vsub.f32 %v536, %v568
    %v573 = vsub.f32 %v564, %v571
    %v574 = vmul.f32 %v572, 1.442695
    %v575 = vpow.pop %v574
    %v576 = vmul.f32 %v573, 1.442695
    %v577 = vpow.pop %v576
    %v578 = vsel %vm138, %v575, 0.0
    %579 = vadd.xlane.f32.xlu0 %v578
    %v580 = vpop.xlane.xlu0 %579
    %v581 = vsel %vm138, %v577, 0.0
    %582 = vadd.xlane.f32.xlu0 %v581
    %v583 = vpop.xlane.xlu0 %582
    %v584 = vrcp.pop %v580
    %v585 = vmul.f32 %v580, %v584
    %v586 = vsub.f32 1.0, %v585
    %v587 = vmul.f32 %v584, %v586
    %v588 = vadd.f32 %v584, %v587
    %vm589 = vweird.f32 %v580
    %vm590 = vweird.f32 %v584
    %vm591 = vmor %vm589, %vm590
    %v592 = vsel %vm591, %v584, %v588
    %v593 = vand.u32 2147483647, %v580
    %vm594 = vcmp.eq.f32.partialorder %v593, 8.507059e+37
    %v595 = vand.u32 %v580, 2147483648
    %v596 = vor.u32 1.1754944e-38, %v595
    %v597 = vsel %vm594, %v596, %v592
    %v598 = vrcp.pop %v583
    %v599 = vmul.f32 %v583, %v598
    %v600 = vsub.f32 1.0, %v599
    %v601 = vmul.f32 %v598, %v600
    %v602 = vadd.f32 %v598, %v601
    %vm603 = vweird.f32 %v583
    %vm604 = vweird.f32 %v598
    %vm605 = vmor %vm603, %vm604
    %v606 = vsel %vm605, %v598, %v602
    %v607 = vand.u32 2147483647, %v583
    %vm608 = vcmp.eq.f32.partialorder %v607, 8.507059e+37
    %v609 = vand.u32 %v583, 2147483648
    %v610 = vor.u32 1.1754944e-38, %v609
    %v611 = vsel %vm608, %v610, %v606
    %v612 = vmul.f32 %v575, %v597
    %v613 = vmul.f32 %v577, %v611
    %614 = vrot.lane.b32.xlu0 %v121, 48
    %v615 = vpop.permute.xlu0 %614
    %v618 = vsel %vm138, %v612, 0
    %620 = vmatpush.msra.mxu0 0.0
    %621 = vmatpush.msra.mxu0 0.0
    %622 = vmatpush.msra.mxu0 0.0
    %623 = vmatpush.msra.mxu0 0.0
    %624 = vmatpush.msra.mxu0 0.0
    %625 = vmatpush.msra.mxu0 0.0
    %626 = vmatpush.msra.mxu0 0.0
    %627 = vmatpush.msra.mxu0 0.0
    %628 = vmatpush.msra.mxu0 0.0
    %629 = vmatpush.msra.mxu0 0.0
    %630 = vmatpush.msra.mxu0 0.0
    %631 = vmatpush.msra.mxu0 0.0
    %632 = vmatpush.msra.mxu0 0.0
    %633 = vmatpush.msra.mxu0 0.0
    %634 = vmatpush.msra.mxu0 0.0
    %635 = vmatpush.msra.mxu0 %v615
    %636 = vmatmul.f32.gmra.mxu0 %v618
    %v637 = vpop.f32.mrf.mxu0
    %v638 = vadd.f32 0.0, %v637
    %639 = vdwg.mxu0
    %640 = vrot.lane.b32.xlu0 %v124, 48
    %v641 = vpop.permute.xlu0 %640
    %v644 = vsel %vm138, %v613, 0
    %646 = vmatpush.msra.mxu0 0.0
    %647 = vmatpush.msra.mxu0 0.0
    %648 = vmatpush.msra.mxu0 0.0
    %649 = vmatpush.msra.mxu0 0.0
    %650 = vmatpush.msra.mxu0 0.0
    %651 = vmatpush.msra.mxu0 0.0
    %652 = vmatpush.msra.mxu0 0.0
    %653 = vmatpush.msra.mxu0 0.0
    %654 = vmatpush.msra.mxu0 0.0
    %655 = vmatpush.msra.mxu0 0.0
    %656 = vmatpush.msra.mxu0 0.0
    %657 = vmatpush.msra.mxu0 0.0
    %658 = vmatpush.msra.mxu0 0.0
    %659 = vmatpush.msra.mxu0 0.0
    %660 = vmatpush.msra.mxu0 0.0
    %661 = vmatpush.msra.mxu0 %v641
    %662 = vmatmul.f32.gmra.mxu0 %v644
    %v663 = vpop.f32.mrf.mxu0
    %v664 = vadd.f32 0.0, %v663
    %665 = vdwg.mxu0
    %v666 = vld [vmem:[%s2 + $0x10] sm:$0xff]
    %v668 = vsel %vm138, %v638, 0
    %v671 = vsel %vm138, %v664, 0
    %673 = vmatpush.msra.mxu0 0.0
    %674 = vmatpush.msra.mxu0 0.0
    %675 = vmatpush.msra.mxu0 0.0
    %676 = vmatpush.msra.mxu0 0.0
    %677 = vmatpush.msra.mxu0 0.0
    %678 = vmatpush.msra.mxu0 0.0
    %679 = vmatpush.msra.mxu0 0.0
    %680 = vmatpush.msra.mxu0 0.0
    %681 = vmatpush.msra.mxu0 0.0
    %682 = vmatpush.msra.mxu0 0.0
    %683 = vmatpush.msra.mxu0 0.0
    %684 = vmatpush.msra.mxu0 0.0
    %685 = vmatpush.msra.mxu0 0.0
    %686 = vmatpush.msra.mxu0 0.0
    %687 = vmatpush.msra.mxu0 0.0
    %688 = vmatpush.msra.mxu0 %v666
    %689 = vmatmul.f32.gmra.mxu0 %v668
    %v690 = vpop.f32.mrf.mxu0
    %v691 = vadd.f32 0.0, %v690
    %692 = vmatmul.f32.gmra.mxu0 %v671
    %v693 = vpop.f32.mrf.mxu0
    %v694 = vadd.f32 0.0, %v693
    %695 = vdwg.mxu0
    %v696 = vadd.f32 %v508, %v691
    %v697 = vadd.f32 %v509, %v694
    %698 = vrot.lane.b32.xlu0 %v121, 104
    %v699 = vpop.permute.xlu0 %698
    %700 = vrot.lane.b32.xlu0 %v121, 72
    %v701 = vpop.permute.xlu0 %700
    %v702 = vsel %vm138, %v699, 0
    %v704 = vsel %vm138, %v701, 0
    %706 = vmatpush.xpose.msra.mxu0 0.0
    %707 = vmatpush.xpose.msra.mxu0 0.0
    %708 = vmatpush.xpose.msra.mxu0 0.0
    %709 = vmatpush.xpose.msra.mxu0 0.0
    %710 = vmatpush.xpose.msra.mxu0 0.0
    %711 = vmatpush.xpose.msra.mxu0 0.0
    %712 = vmatpush.xpose.msra.mxu0 0.0
    %713 = vmatpush.xpose.msra.mxu0 0.0
    %714 = vmatpush.xpose.msra.mxu0 0.0
    %715 = vmatpush.xpose.msra.mxu0 0.0
    %716 = vmatpush.xpose.msra.mxu0 0.0
    %717 = vmatpush.xpose.msra.mxu0 0.0
    %718 = vmatpush.xpose.msra.mxu0 0.0
    %719 = vmatpush.xpose.msra.mxu0 0.0
    %720 = vmatpush.xpose.msra.mxu0 0.0
    %721 = vmatpush.xpose.msra.mxu0 %v704
    %722 = vmatmul.f32.gmra.mxu0 %v702
    %v723 = vpop.f32.mrf.mxu0
    %v724 = vadd.f32 %v131, %v723
    %725 = vdwg.mxu0
    %726 = vrot.lane.b32.xlu0 %v124, 104
    %v727 = vpop.permute.xlu0 %726
    %728 = vrot.lane.b32.xlu0 %v124, 72
    %v729 = vpop.permute.xlu0 %728
    %v730 = vsel %vm138, %v727, 0
    %v732 = vsel %vm138, %v729, 0
    %734 = vmatpush.xpose.msra.mxu0 0.0
    %735 = vmatpush.xpose.msra.mxu0 0.0
    %736 = vmatpush.xpose.msra.mxu0 0.0
    %737 = vmatpush.xpose.msra.mxu0 0.0
    %738 = vmatpush.xpose.msra.mxu0 0.0
    %739 = vmatpush.xpose.msra.mxu0 0.0
    %740 = vmatpush.xpose.msra.mxu0 0.0
    %741 = vmatpush.xpose.msra.mxu0 0.0
    %742 = vmatpush.xpose.msra.mxu0 0.0
    %743 = vmatpush.xpose.msra.mxu0 0.0
    %744 = vmatpush.xpose.msra.mxu0 0.0
    %745 = vmatpush.xpose.msra.mxu0 0.0
    %746 = vmatpush.xpose.msra.mxu0 0.0
    %747 = vmatpush.xpose.msra.mxu0 0.0
    %748 = vmatpush.xpose.msra.mxu0 0.0
    %749 = vmatpush.xpose.msra.mxu0 %v732
    %750 = vmatmul.f32.gmra.mxu0 %v730
    %v751 = vpop.f32.mrf.mxu0
    %v752 = vadd.f32 %v131, %v751
    %753 = vdwg.mxu0
    %v754 = vsel %vm138, %v724, -inf
    %755 = vmax.xlane.f32.xlu0 %v754
    %v756 = vpop.xlane.xlu0 %755
    %v757 = vsel %vm138, %v752, -inf
    %758 = vmax.xlane.f32.xlu0 %v757
    %v759 = vpop.xlane.xlu0 %758
    %v760 = vsub.f32 %v724, %v756
    %v761 = vsub.f32 %v752, %v759
    %v762 = vmul.f32 %v760, 1.442695
    %v763 = vpow.pop %v762
    %v764 = vmul.f32 %v761, 1.442695
    %v765 = vpow.pop %v764
    %v766 = vsel %vm138, %v763, 0.0
    %767 = vadd.xlane.f32.xlu0 %v766
    %v768 = vpop.xlane.xlu0 %767
    %v769 = vsel %vm138, %v765, 0.0
    %770 = vadd.xlane.f32.xlu0 %v769
    %v771 = vpop.xlane.xlu0 %770
    %v772 = vrcp.pop %v768
    %v773 = vmul.f32 %v768, %v772
    %v774 = vsub.f32 1.0, %v773
    %v775 = vmul.f32 %v772, %v774
    %v776 = vadd.f32 %v772, %v775
    %vm777 = vweird.f32 %v768
    %vm778 = vweird.f32 %v772
    %vm779 = vmor %vm777, %vm778
    %v780 = vsel %vm779, %v772, %v776
    %v781 = vand.u32 2147483647, %v768
    %vm782 = vcmp.eq.f32.partialorder %v781, 8.507059e+37
    %v783 = vand.u32 %v768, 2147483648
    %v784 = vor.u32 1.1754944e-38, %v783
    %v785 = vsel %vm782, %v784, %v780
    %v786 = vrcp.pop %v771
    %v787 = vmul.f32 %v771, %v786
    %v788 = vsub.f32 1.0, %v787
    %v789 = vmul.f32 %v786, %v788
    %v790 = vadd.f32 %v786, %v789
    %vm791 = vweird.f32 %v771
    %vm792 = vweird.f32 %v786
    %vm793 = vmor %vm791, %vm792
    %v794 = vsel %vm793, %v786, %v790
    %v795 = vand.u32 2147483647, %v771
    %vm796 = vcmp.eq.f32.partialorder %v795, 8.507059e+37
    %v797 = vand.u32 %v771, 2147483648
    %v798 = vor.u32 1.1754944e-38, %v797
    %v799 = vsel %vm796, %v798, %v794
    %v800 = vmul.f32 %v763, %v785
    %v801 = vmul.f32 %v765, %v799
    %802 = vrot.lane.b32.xlu0 %v121, 40
    %v803 = vpop.permute.xlu0 %802
    %v806 = vsel %vm138, %v800, 0
    %808 = vmatpush.msra.mxu0 0.0
    %809 = vmatpush.msra.mxu0 0.0
    %810 = vmatpush.msra.mxu0 0.0
    %811 = vmatpush.msra.mxu0 0.0
    %812 = vmatpush.msra.mxu0 0.0
    %813 = vmatpush.msra.mxu0 0.0
    %814 = vmatpush.msra.mxu0 0.0
    %815 = vmatpush.msra.mxu0 0.0
    %816 = vmatpush.msra.mxu0 0.0
    %817 = vmatpush.msra.mxu0 0.0
    %818 = vmatpush.msra.mxu0 0.0
    %819 = vmatpush.msra.mxu0 0.0
    %820 = vmatpush.msra.mxu0 0.0
    %821 = vmatpush.msra.mxu0 0.0
    %822 = vmatpush.msra.mxu0 0.0
    %823 = vmatpush.msra.mxu0 %v803
    %824 = vmatmul.f32.gmra.mxu0 %v806
    %v825 = vpop.f32.mrf.mxu0
    %v826 = vadd.f32 0.0, %v825
    %827 = vdwg.mxu0
    %828 = vrot.lane.b32.xlu0 %v124, 40
    %v829 = vpop.permute.xlu0 %828
    %v832 = vsel %vm138, %v801, 0
    %834 = vmatpush.msra.mxu0 0.0
    %835 = vmatpush.msra.mxu0 0.0
    %836 = vmatpush.msra.mxu0 0.0
    %837 = vmatpush.msra.mxu0 0.0
    %838 = vmatpush.msra.mxu0 0.0
    %839 = vmatpush.msra.mxu0 0.0
    %840 = vmatpush.msra.mxu0 0.0
    %841 = vmatpush.msra.mxu0 0.0
    %842 = vmatpush.msra.mxu0 0.0
    %843 = vmatpush.msra.mxu0 0.0
    %844 = vmatpush.msra.mxu0 0.0
    %845 = vmatpush.msra.mxu0 0.0
    %846 = vmatpush.msra.mxu0 0.0
    %847 = vmatpush.msra.mxu0 0.0
    %848 = vmatpush.msra.mxu0 0.0
    %849 = vmatpush.msra.mxu0 %v829
    %850 = vmatmul.f32.gmra.mxu0 %v832
    %v851 = vpop.f32.mrf.mxu0
    %v852 = vadd.f32 0.0, %v851
    %853 = vdwg.mxu0
    %v854 = vld [vmem:[%s2 + $0x18] sm:$0xff]
    %v856 = vsel %vm138, %v826, 0
    %v859 = vsel %vm138, %v852, 0
    %861 = vmatpush.msra.mxu0 0.0
    %862 = vmatpush.msra.mxu0 0.0
    %863 = vmatpush.msra.mxu0 0.0
    %864 = vmatpush.msra.mxu0 0.0
    %865 = vmatpush.msra.mxu0 0.0
    %866 = vmatpush.msra.mxu0 0.0
    %867 = vmatpush.msra.mxu0 0.0
    %868 = vmatpush.msra.mxu0 0.0
    %869 = vmatpush.msra.mxu0 0.0
    %870 = vmatpush.msra.mxu0 0.0
    %871 = vmatpush.msra.mxu0 0.0
    %872 = vmatpush.msra.mxu0 0.0
    %873 = vmatpush.msra.mxu0 0.0
    %874 = vmatpush.msra.mxu0 0.0
    %875 = vmatpush.msra.mxu0 0.0
    %876 = vmatpush.msra.mxu0 %v854
    %877 = vmatmul.f32.gmra.mxu0 %v856
    %v878 = vpop.f32.mrf.mxu0
    %v879 = vadd.f32 0.0, %v878
    %880 = vmatmul.f32.gmra.mxu0 %v859
    %v881 = vpop.f32.mrf.mxu0
    %v882 = vadd.f32 0.0, %v881
    %883 = vdwg.mxu0
    %v884 = vadd.f32 %v696, %v879
    %v885 = vadd.f32 %v697, %v882
    %v886 = vsel %vm34, %v884, 0.0
    %887 = vadd.xlane.f32.xlu0 %v886
    %v888 = vpop.xlane.xlu0 %887
    %v889 = vsel %vm34, %v885, 0.0
    %890 = vadd.xlane.f32.xlu0 %v889
    %v891 = vpop.xlane.xlu0 %890
    %v892 = vmul.f32 %v888, %v47
    %v893 = vmul.f32 %v891, %v47
    %v894 = vsub.f32 %v884, %v892
    %v895 = vsub.f32 %v885, %v893
    %v896 = vmul.f32 %v894, %v894
    %v897 = vmul.f32 %v895, %v895
    %v898 = vsel %vm34, %v896, 0.0
    %899 = vadd.xlane.f32.xlu0 %v898
    %v900 = vpop.xlane.xlu0 %899
    %v901 = vsel %vm34, %v897, 0.0
    %902 = vadd.xlane.f32.xlu0 %v901
    %v903 = vpop.xlane.xlu0 %902
    %v904 = vmul.f32 %v900, %v47
    %v905 = vmul.f32 %v903, %v47
    %v906 = vadd.f32 %v904, 1e-05
    %v907 = vadd.f32 %v905, 1e-05
    %v908 = vrsqrt.pop %v906
    %v909 = vmul.f32 %v908, %v906
    %v910 = vmul.f32 %v909, %v908
    %v911 = vmul.f32 0.5, %v910
    %v912 = vsub.f32 1.5, %v911
    %v913 = vmul.f32 %v908, %v912
    %vm914 = vweird.f32 %v906
    %vm915 = vweird.f32 %v908
    %vm916 = vmor %vm914, %vm915
    %v917 = vsel %vm916, %v908, %v913
    %v918 = vrsqrt.pop %v907
    %v919 = vmul.f32 %v918, %v907
    %v920 = vmul.f32 %v919, %v918
    %v921 = vmul.f32 0.5, %v920
    %v922 = vsub.f32 1.5, %v921
    %v923 = vmul.f32 %v918, %v922
    %vm924 = vweird.f32 %v907
    %vm925 = vweird.f32 %v918
    %vm926 = vmor %vm924, %vm925
    %v927 = vsel %vm926, %v918, %v923
    %v928 = vmul.f32 %v894, %v917
    %v929 = vmul.f32 %v895, %v927
    %v930 = vperm.slane %v30, 0
    %v931 = vmul.f32 %v930, %v928
    %v932 = vmul.f32 %v930, %v929
    %v933 = vperm.slane %v31, 0
    %v934 = vadd.f32 %v931, %v933
    %v935 = vadd.f32 %v932, %v933
    %v936 = vld [vmem:[%s3] sm:$0xff]
    %v937 = vld [vmem:[%s3 + $0x8] sm:$0xff]
    %v938 = vld [vmem:[%s3 + $0x10] sm:$0xff]
    %v939 = vld [vmem:[%s3 + $0x18] sm:$0xff]
    %v940 = vperm.slane %v32, 0
    %v942 = vsel %vm34, %v934, 0
    %v945 = vsel %vm34, %v935, 0
    %947 = vmatpush.msra.mxu0 0.0
    %948 = vmatpush.msra.mxu0 0.0
    %949 = vmatpush.msra.mxu0 0.0
    %950 = vmatpush.msra.mxu0 0.0
    %951 = vmatpush.msra.mxu0 0.0
    %952 = vmatpush.msra.mxu0 0.0
    %953 = vmatpush.msra.mxu0 0.0
    %954 = vmatpush.msra.mxu0 0.0
    %955 = vmatpush.msra.mxu0 0.0
    %956 = vmatpush.msra.mxu0 0.0
    %957 = vmatpush.msra.mxu0 0.0
    %958 = vmatpush.msra.mxu0 0.0
    %959 = vmatpush.msra.mxu0 %v939
    %960 = vmatpush.msra.mxu0 %v938
    %961 = vmatpush.msra.mxu0 %v937
    %962 = vmatpush.msra.mxu0 %v936
    %963 = vmatmul.f32.gmra.mxu0 %v942
    %v964 = vpop.f32.mrf.mxu0
    %v965 = vadd.f32 %v940, %v964
    %966 = vmatmul.f32.gmra.mxu0 %v945
    %v967 = vpop.f32.mrf.mxu0
    %v968 = vadd.f32 %v940, %v967
    %969 = vdwg.mxu0
    %v970 = vmul.f32 %v965, 0.5
    %v971 = vmul.f32 %v968, 0.5
    %v972 = vmul.f32 %v965, 0.044715
    %v973 = vmul.f32 %v968, 0.044715
    %v974 = vmul.f32 %v972, %v965
    %v975 = vmul.f32 %v973, %v968
    %v976 = vmul.f32 %v974, %v965
    %v977 = vmul.f32 %v975, %v968
    %v978 = vadd.f32 %v965, %v976
    %v979 = vadd.f32 %v968, %v977
    %v980 = vmul.f32 %v978, 0.7978845
    %v981 = vmul.f32 %v979, 0.7978845
    %v982 = vtanh.pop %v980
    %v983 = vtanh.pop %v981
    %v984 = vadd.f32 %v982, 1.0
    %v985 = vadd.f32 %v983, 1.0
    %v986 = vmul.f32 %v970, %v984
    %v987 = vmul.f32 %v971, %v985
    %v988 = vld [vmem:[%s4] sm:$0xff]
    %v989 = vld [vmem:[%s4 + $0x8] sm:$0xff]
    %v990 = vld [vmem:[%s4 + $0x10] sm:$0xff]
    %v991 = vld [vmem:[%s4 + $0x18] sm:$0xff]
    %v992 = vld [vmem:[%s4 + $0x20] sm:$0xff]
    %v993 = vld [vmem:[%s4 + $0x28] sm:$0xff]
    %v994 = vld [vmem:[%s4 + $0x30] sm:$0xff]
    %v995 = vld [vmem:[%s4 + $0x38] sm:$0xff]
    %v996 = vld [vmem:[%s4 + $0x40] sm:$0xff]
    %v997 = vld [vmem:[%s4 + $0x48] sm:$0xff]
    %v998 = vld [vmem:[%s4 + $0x50] sm:$0xff]
    %v999 = vld [vmem:[%s4 + $0x58] sm:$0xff]
    %v1000 = vld [vmem:[%s4 + $0x60] sm:$0xff]
    %v1001 = vld [vmem:[%s4 + $0x68] sm:$0xff]
    %v1002 = vld [vmem:[%s4 + $0x70] sm:$0xff]
    %v1003 = vld [vmem:[%s4 + $0x78] sm:$0xff]
    %v1004 = vperm.slane %v33, 0
    %1005 = vmatpush.msra.mxu0 %v1003
    %1006 = vmatpush.msra.mxu0 %v1002
    %1007 = vmatpush.msra.mxu0 %v1001
    %1008 = vmatpush.msra.mxu0 %v1000
    %1009 = vmatpush.msra.mxu0 %v999
    %1010 = vmatpush.msra.mxu0 %v998
    %1011 = vmatpush.msra.mxu0 %v997
    %1012 = vmatpush.msra.mxu0 %v996
    %1013 = vmatpush.msra.mxu0 %v995
    %1014 = vmatpush.msra.mxu0 %v994
    %1015 = vmatpush.msra.mxu0 %v993
    %1016 = vmatpush.msra.mxu0 %v992
    %1017 = vmatpush.msra.mxu0 %v991
    %1018 = vmatpush.msra.mxu0 %v990
    %1019 = vmatpush.msra.mxu0 %v989
    %1020 = vmatpush.msra.mxu0 %v988
    %1021 = vmatmul.f32.gmra.mxu0 %v986
    %v1022 = vpop.f32.mrf.mxu0
    %v1023 = vadd.f32 %v1004, %v1022
    %1024 = vmatmul.f32.gmra.mxu0 %v987
    %v1025 = vpop.f32.mrf.mxu0
    %v1026 = vadd.f32 %v1004, %v1025
    %1027 = vdwg.mxu0
    %v1028 = vadd.f32 %v1023, %v884
    %v1029 = vadd.f32 %v1026, %v885
    %1030 = vst.msk [vmem:[#allocation2] sm:$0xff] %vm34, %v1028
    %1031 = vst.msk [vmem:[#allocation2 + $0x8] sm:$0xff] %vm34, %v1029
    // Predicated region
    $region26: #{tpu_custom_call.1} parent=1 // pred_check
      _
    $region27: #{tpu_custom_call.1} parent=1 // pred_check_branch
      %1033 = sbr.rel (0) target = $region29
    $region28: #{tpu_custom_call.1} parent=1 // pred_region
      %1035 = vsyncadd [#allocation3], 0
      %s1036 = sshll.u32 [#allocation2], 4
      %s1037 = int_to_ptr.vmem [resolvable:$true] %s1036
      %s1038 = sshll.u32 %s6, 4
      %s1039 = int_to_ptr.hbm [resolvable:$true] %s1038
      %1044 = dma.vmem_to_hbm [thread:$0]  %s1037, 256, %s1039, [#allocation3], 128, 128, 8
    $region29: #{tpu_custom_call.1} parent=1 // pred_fallthru
      _
    // Predicated region
    $region30: #{tpu_custom_call.1} parent=1 // pred_check
      _
    $region31: #{tpu_custom_call.1} parent=1 // pred_check_branch
      %1046 = sbr.rel (0) target = $region33
    $region32: #{tpu_custom_call.1} parent=1 // pred_region
      %1048 = dma.done [#allocation3], 256
    $region33: #{tpu_custom_call.1} parent=1 // pred_fallthru
      _
    %1049 = vsyncpa [#allocation3], 1

</llo_original>
